<compile_context>
chip_gen: v5e
topology: v5e:2x2
jax: 0.10.0
libtpu: 0.0.40
codegen_flags: <defaults>
</compile_context>

<pallas_src>
import functools

import numpy as np
import jax
import jax.numpy as jnp
from jax.experimental import pallas as pl
from jax.experimental.pallas import tpu as pltpu

# ----------------------- config (DNLCWN(in=4, out=4, k=3) defaults) ----------
B = 2
IN_C = 4
OUT_C = 4
H = W = 16
K_MAIN = 3                      # DNLCWN kernel_size
STRIDE_MAIN = 1                 # DNLCWN stride
REDUCTION = 2
RC = IN_C // REDUCTION if IN_C > REDUCTION else 1   # reduction_channels
K_DNLC = 3                      # DNLCLayer conv kernel size
STRIDE_DNLC = 2                 # DNLCLayer conv stride
# gap_mode='prior', bn=False (defaults)


# ----------------------------- glue helpers ----------------------------------
def _im2col(x, k, stride, pad):
    """x: (b, c, h, w) -> patches (b, c*k*k, ho*wo); flatten order = (c, dy, dx)."""
    b, c, h, w = x.shape
    xp = jnp.pad(x, ((0, 0), (0, 0), (pad, pad), (pad, pad)))
    ho = (h + 2 * pad - k) // stride + 1
    wo = (w + 2 * pad - k) // stride + 1
    cols = []
    for dy in range(k):
        for dx in range(k):
            sl = xp[:, :,
                    dy:dy + (ho - 1) * stride + 1:stride,
                    dx:dx + (wo - 1) * stride + 1:stride]          # (b, c, ho, wo)
            cols.append(sl.reshape(b, c, ho * wo))
    p = jnp.stack(cols, axis=2).reshape(b, c * k * k, ho * wo)
    return p, ho, wo


def _block_diag_weight(w_grouped, in_c):
    """Expand grouped conv weight (groups == out_channels) to dense block-diag."""
    out_c, ipg = w_grouped.shape[0], w_grouped.shape[1]
    spatial = w_grouped.shape[2:]
    full = jnp.zeros((out_c, in_c) + spatial, w_grouped.dtype)
    for g in range(out_c):
        full = full.at[g, g * ipg:(g + 1) * ipg].set(w_grouped[g])
    return full


# ----------------------------- fused Pallas kernel ----------------------------
def _dnlcwn_kernel(p1_ref, x2d_ref, consts_ref, out_ref, *,
                   batch, rc, out_c, in_c, l1, l2, k, w_img, kp1p,
                   r_mask, r_cmx, r_wtp, r_neg, r_wfc, r_sel, r_gb):
    f32 = jnp.float32
    nbr = batch * rc
    nbo = batch * out_c
    pad = k // 2

    # ---- (1) theta/phi for both samples: one (2rc,kp1+1)@(kp1+1,B*l1) ------
    wtp = consts_ref[r_wtp:r_wtp + 2 * rc, 0:kp1p]                  # (4, 37)
    tp = jnp.dot(wtp, p1_ref[...], preferred_element_type=f32)      # (4, 128)
    theta = tp[0:rc, :]                                             # (2, 128)
    phi = tp[rc:2 * rc, :]                                          # (2, 128)

    # ---- (2) both per-sample gram matrices from ONE dot --------------------
    cmx = consts_ref[r_cmx:r_cmx + nbr, 0:batch * l1]               # (4, 128)
    t4 = jnp.concatenate([theta] * batch, axis=0) * cmx             # (4, 128)
    p4 = jnp.concatenate([phi] * batch, axis=0)                     # (4, 128)
    gram = jax.lax.dot_general(t4, p4, (((1,), (1,)), ((), ())),
                               preferred_element_type=f32)          # (4, 4)
    gram = gram + consts_ref[r_neg:r_neg + nbr, 0:nbr]              # off-block -> -1e30
    gram = gram - jnp.max(gram, axis=-1, keepdims=True)
    e = jnp.exp(gram)
    mat = e / jnp.sum(e, axis=-1, keepdims=True)                    # (4, 4), 0 off-block

    # ---- (3) GAP + grouped 1x1 fc for both samples --------------------------
    x2d = x2d_ref[...]                                              # (8, 256)
    gap = jnp.sum(x2d, axis=1, keepdims=True) * (1.0 / l2)          # (8, 1)
    wfc = consts_ref[r_wfc:r_wfc + nbr, 0:batch * in_c]             # (4, 8)
    bfc = consts_ref[r_wfc:r_wfc + nbr, batch * in_c:batch * in_c + 1]   # (4, 1)
    g = jnp.dot(wfc, gap, preferred_element_type=f32) + bfc         # (4, 1)

    # ---- (4) DNLC output + per-(sample, out-channel) scale ------------------
    d = jnp.dot(mat, g, preferred_element_type=f32)                 # (4, 1)
    sel = consts_ref[r_sel:r_sel + nbo, 0:nbr]                      # (8, 4)
    scale = jnp.dot(sel, d, preferred_element_type=f32)             # (8, 1)

    # ---- (5) register-resident stride-1 im2col (both samples at once) -------
    taps = []
    for dy in range(k):
        for dx in range(k):
            off = (dy - pad) * w_img + (dx - pad)
            shift = (-off) % l2
            rolled = x2d if shift == 0 else pltpu.roll(x2d, shift=shift, axis=1)
            m_row = r_mask + dy * k + dx
            m = consts_ref[m_row:m_row + 1, :]                      # (1, 256)
            taps.append(rolled * m)
    p2 = jnp.concatenate(taps, axis=0)                              # (72, 256)

    # ---- (6) dynamic conv: both samples, W- and B-parts in one matmul -------
    gbig = consts_ref[r_gb:r_gb + 2 * nbo, 0:k * k * batch * in_c]  # (16, 72)
    ab = jnp.dot(gbig, p2, preferred_element_type=f32)              # (16, 256)
    out_ref[...] = scale * ab[0:nbo, :] + ab[nbo:2 * nbo, :]        # single (8,256) store


# ----------------------------- module forward ---------------------------------
def dnlcwn_forward(x, params):
    b, c, h, w = x.shape
    assert STRIDE_MAIN == 1 and K_MAIN % 2 == 1 and OUT_C % RC == 0
    l2 = h * w
    kp1 = c * K_DNLC * K_DNLC
    kp2 = c * K_MAIN * K_MAIN

    # ---- DNLC patches (stride 2), batch-concatenated along lanes, ones row --
    pad_d = (K_DNLC - 1) // 2
    p1, ho1, wo1 = _im2col(x, K_DNLC, STRIDE_DNLC, pad_d)          # (b, kp1, l1)
    l1 = ho1 * wo1
    p1_2d = jnp.transpose(p1, (1, 0, 2)).reshape(kp1, b * l1)      # (kp1, b*l1)
    p1_aug = jnp.concatenate(
        [p1_2d, jnp.ones((1, b * l1), p1_2d.dtype)], axis=0)       # (kp1+1, b*l1)

    # ---- flattened x: one full (8, 256) tile ---------------------------------
    x2d = x.reshape(b * c, l2)

    # ---- constants (all packed into ONE array) -------------------------------
    # theta/phi stacked dense weights with bias column
    wt = _block_diag_weight(params["w_theta"], c).reshape(RC, kp1)
    wp = _block_diag_weight(params["w_phi"], c).reshape(RC, kp1)
    w_tp = jnp.concatenate([wt, wp], axis=0)
    b_tp = jnp.concatenate([params["b_theta"], params["b_phi"]])[:, None]
    wtp_aug = jnp.concatenate([w_tp, b_tp], axis=1)                # (2*RC, kp1+1)

    # fc(gap): per-sample block-diagonal + bias column
    wf = _block_diag_weight(params["w_fc_g"], c).reshape(RC, c)    # (RC, C)
    wfc_blk = jnp.kron(jnp.eye(b, dtype=x.dtype), wf)              # (B*RC, B*C)
    bfc_col = jnp.tile(params["b_fc_g"][:, None], (b, 1))          # (B*RC, 1)
    wfc_aug = jnp.concatenate([wfc_blk, bfc_col], axis=1)          # (B*RC, B*C+1)

    # tap boundary masks (zero padding of the main conv)
    pad_m = K_MAIN // 2
    ys, xs = np.divmod(np.arange(l2), w)
    masks = np.zeros((K_MAIN * K_MAIN, l2), np.float32)
    for dy in range(K_MAIN):
        for dx in range(K_MAIN):
            ok = ((ys + dy - pad_m >= 0) & (ys + dy - pad_m <= h - 1) &
                  (xs + dx - pad_m >= 0) & (xs + dx - pad_m <= w - 1))
            masks[dy * K_MAIN + dx] = ok.astype(np.float32)

    # per-sample column masks for the gram computation
    cmx = np.zeros((b * RC, b * l1), np.float32)
    for s in range(b):
        cmx[s * RC:(s + 1) * RC, s * l1:(s + 1) * l1] = 1.0

    # additive mask killing cross-sample blocks before the softmax
    neg = np.full((b * RC, b * RC), -1e30, np.float32)
    for s in range(b):
        neg[s * RC:(s + 1) * RC, s * RC:(s + 1) * RC] = 0.0

    # selection matrix: scale[s*OUT_C+oc] = d[s*RC + oc // (OUT_C//RC)]
    sel = np.zeros((b * OUT_C, b * RC), np.float32)
    rep = OUT_C // RC
    for s in range(b):
        for oc in range(OUT_C):
            sel[s * OUT_C + oc, s * RC + oc // rep] = 1.0

    # block-diagonal dynamic-conv generator [Wgen-part ; Bgen-part]
    w_gen2 = params["w_gen"].reshape(OUT_C, c, K_MAIN, K_MAIN)
    w_gen2 = jnp.transpose(w_gen2, (0, 2, 3, 1)).reshape(OUT_C, K_MAIN * K_MAIN, c)
    b_gen2 = params["b_gen"].reshape(OUT_C, c, K_MAIN, K_MAIN)
    b_gen2 = jnp.transpose(b_gen2, (0, 2, 3, 1)).reshape(OUT_C, K_MAIN * K_MAIN, c)
    eye_b = jnp.eye(b, dtype=x.dtype)
    g_w = jnp.einsum("st,oki->sokti", eye_b, w_gen2).reshape(
        b * OUT_C, K_MAIN * K_MAIN * b * c)
    g_b = jnp.einsum("st,oki->sokti", eye_b, b_gen2).reshape(
        b * OUT_C, K_MAIN * K_MAIN * b * c)
    gbig = jnp.concatenate([g_w, g_b], axis=0)                     # (2*B*OUT_C, 9*B*C)

    # ---- pack constants into one (rows_pad, l2) array -------------------------
    r_mask = 0
    r_cmx = r_mask + K_MAIN * K_MAIN
    r_wtp = r_cmx + b * RC
    r_neg = r_wtp + 2 * RC
    r_wfc = r_neg + b * RC
    r_sel = r_wfc + b * RC
    r_gb = r_sel + b * OUT_C
    rows = r_gb + 2 * b * OUT_C
    rows_pad = -(-rows // 8) * 8

    def place(buf, r0, block):
        blk = jnp.asarray(block, jnp.float32)
        return buf.at[r0:r0 + blk.shape[0], 0:blk.shape[1]].set(blk)

    consts = jnp.zeros((rows_pad, l2), jnp.float32)
    consts = place(consts, r_mask, masks)
    consts = place(consts, r_cmx, cmx)
    consts = place(consts, r_wtp, wtp_aug)
    consts = place(consts, r_neg, neg)
    consts = place(consts, r_wfc, wfc_aug)
    consts = place(consts, r_sel, sel)
    consts = place(consts, r_gb, gbig)

    kernel = functools.partial(
        _dnlcwn_kernel, batch=b, rc=RC, out_c=OUT_C, in_c=c,
        l1=l1, l2=l2, k=K_MAIN, w_img=w, kp1p=kp1 + 1,
        r_mask=r_mask, r_cmx=r_cmx, r_wtp=r_wtp, r_neg=r_neg,
        r_wfc=r_wfc, r_sel=r_sel, r_gb=r_gb)

    out = pl.pallas_call(
        kernel,
        out_shape=jax.ShapeDtypeStruct((b * OUT_C, l2), jnp.float32),
        grid=(1,),
        in_specs=[
            pl.BlockSpec((kp1 + 1, b * l1), lambda i: (0, 0)),     # p1_aug
            pl.BlockSpec((b * c, l2), lambda i: (0, 0)),           # x2d
            pl.BlockSpec((rows_pad, l2), lambda i: (0, 0)),        # packed constants
        ],
        out_specs=pl.BlockSpec((b * OUT_C, l2), lambda i: (0, 0)),
        compiler_params=pltpu.CompilerParams(
            dimension_semantics=("arbitrary",)),
    )(p1_aug, x2d, consts)

    return out.reshape(b, OUT_C, h, w)


# ----------------------------- deterministic params ---------------------------
def init_params(key):
    ks = jax.random.split(key, 8)
    ipg = IN_C // RC                       # input channels per group
    n = OUT_C * IN_C * K_MAIN * K_MAIN
    p = {
        "w_theta": 0.1 * jax.random.normal(ks[0], (RC, ipg, K_DNLC, K_DNLC), jnp.float32),
        "b_theta": 0.1 * jax.random.normal(ks[1], (RC,), jnp.float32),
        "w_phi":   0.1 * jax.random.normal(ks[2], (RC, ipg, K_DNLC, K_DNLC), jnp.float32),
        "b_phi":   0.1 * jax.random.normal(ks[3], (RC,), jnp.float32),
        "w_fc_g":  0.1 * jax.random.normal(ks[4], (RC, ipg, 1, 1), jnp.float32),
        "b_fc_g":  0.1 * jax.random.normal(ks[5], (RC,), jnp.float32),
        "w_gen":   0.1 * jax.random.normal(ks[6], (n, 1, 1, 1), jnp.float32),
        "b_gen":   0.1 * jax.random.normal(ks[7], (n,), jnp.float32),
    }
    # DNLCLayer.W is defined in __init__ but never used in forward -> omitted.
    return p


# ----------------------------- pure-JAX reference -----------------------------
def _conv2d(x, w, b=None, stride=1, padding=0, groups=1):
    out = jax.lax.conv_general_dilated(
        x, w, window_strides=(stride, stride),
        padding=((padding, padding), (padding, padding)),
        dimension_numbers=("NCHW", "OIHW", "NCHW"),
        feature_group_count=groups,
        precision=jax.lax.Precision.HIGHEST)
    if b is not None:
        out = out + b.reshape(1, -1, 1, 1)
    return out


def reference_forward(x, params):
    b = x.shape[0]
    pad = (K_DNLC - 1) // 2
    theta = _conv2d(x, params["w_theta"], params["b_theta"],
                    stride=STRIDE_DNLC, padding=pad, groups=RC)
    _, c, _, _ = theta.shape
    theta = theta.reshape(b, c, -1)
    phi = _conv2d(x, params["w_phi"], params["b_phi"],
                  stride=STRIDE_DNLC, padding=pad, groups=RC).reshape(b, c, -1)
    mat = jnp.einsum("bcl,bdl->bcd", theta, phi, precision=jax.lax.Precision.HIGHEST)
    mat = jax.nn.softmax(mat, axis=-1)
    gap = jnp.mean(x, axis=(2, 3), keepdims=True)
    g = _conv2d(gap, params["w_fc_g"], params["b_fc_g"],
                stride=STRIDE_DNLC, padding=0, groups=RC).squeeze(-1)     # (b, RC, 1)
    out = jnp.einsum("bcd,bdk->bck", mat, g,
                     precision=jax.lax.Precision.HIGHEST)[..., None]      # (b, RC, 1, 1)
    x_w = _conv2d(out, params["w_gen"], params["b_gen"], stride=1, padding=0, groups=RC)
    xr = x.reshape(1, -1, x.shape[2], x.shape[3])
    w_dyn = x_w.reshape(-1, IN_C, K_MAIN, K_MAIN)
    y = jax.lax.conv_general_dilated(
        xr, w_dyn, window_strides=(STRIDE_MAIN, STRIDE_MAIN),
        padding=((K_MAIN // 2, K_MAIN // 2),) * 2,
        dimension_numbers=("NCHW", "OIHW", "NCHW"),
        feature_group_count=b,
        precision=jax.lax.Precision.HIGHEST)
    return y.reshape(-1, OUT_C, y.shape[2], y.shape[3])


# ----------------------------- main -------------------------------------------
if __name__ == "__main__":
    key = jax.random.PRNGKey(0)
    pkey, xkey = jax.random.split(key)
    params = init_params(pkey)
    x = jax.random.normal(xkey, (B, IN_C, H, W), jnp.float32)

    y = jax.jit(lambda xx: dnlcwn_forward(xx, params))(x)
    y = jax.block_until_ready(y)

    assert y.shape == (B, OUT_C, H, W), y.shape
    y_ref = reference_forward(x, params)
    if not bool(jnp.allclose(y, y_ref, atol=5e-3, rtol=5e-3)):
        raise AssertionError(
            f"Pallas/reference mismatch, max abs err = {float(jnp.max(jnp.abs(y - y_ref)))}")
    print("KERNEL_OK")
</pallas_src>

<mosaic_0001>
module attributes {stable_mosaic.version = 11 : i64} {
  func.func @_dnlcwn_kernel(%arg0: i32, %arg1: memref<37x128xf32, #tpu.memory_space<vmem>>, %arg2: memref<8x256xf32, #tpu.memory_space<vmem>>, %arg3: memref<56x256xf32, #tpu.memory_space<vmem>>, %arg4: memref<8x256xf32, #tpu.memory_space<vmem>>) attributes {dimension_semantics = [#tpu.dimension_semantics<arbitrary>], iteration_bounds = array<i64: 1>, scalar_prefetch = 0 : i64, scratch_operands = 0 : i64, tpu.core_type = #tpu.core_type<tc>, window_params = [{pipeline_mode = #tpu.pipeline_mode<synchronous>, transform_indices = @transform_0, window_bounds = array<i64: 37, 128>}, {pipeline_mode = #tpu.pipeline_mode<synchronous>, transform_indices = @transform_1, window_bounds = array<i64: 8, 256>}, {pipeline_mode = #tpu.pipeline_mode<synchronous>, transform_indices = @transform_2, window_bounds = array<i64: 56, 256>}, {pipeline_mode = #tpu.pipeline_mode<synchronous>, transform_indices = @transform_3, window_bounds = array<i64: 8, 256>}]} {
    %c13 = arith.constant 13 : index
    %c0 = arith.constant 0 : index
    %0 = vector.load %arg3[%c13, %c0] : memref<56x256xf32, #tpu.memory_space<vmem>>, vector<4x37xf32>
    %c0_0 = arith.constant 0 : index
    %c0_1 = arith.constant 0 : index
    %1 = vector.load %arg1[%c0_0, %c0_1] : memref<37x128xf32, #tpu.memory_space<vmem>>, vector<37x128xf32>
    %cst = arith.constant dense<0.000000e+00> : vector<4x128xf32>
    %2 = tpu.matmul %0, %1, %cst {dimension_numbers = #tpu.dot_dimension_numbers<[1], [0], [0], [1], [0, 0, 1, 1], [], []>} : vector<4x37xf32>, vector<37x128xf32>, vector<4x128xf32> -> vector<4x128xf32>
    %3 = vector.extract_strided_slice %2 {offsets = [0, 0], sizes = [2, 128], strides = [1, 1]} : vector<4x128xf32> to vector<2x128xf32>
    %4 = vector.extract_strided_slice %2 {offsets = [2, 0], sizes = [2, 128], strides = [1, 1]} : vector<4x128xf32> to vector<2x128xf32>
    %c9 = arith.constant 9 : index
    %c0_2 = arith.constant 0 : index
    %5 = vector.load %arg3[%c9, %c0_2] : memref<56x256xf32, #tpu.memory_space<vmem>>, vector<4x128xf32>
    %6 = tpu.concatenate %3, %3 in 0 : vector<2x128xf32>, vector<2x128xf32> -> vector<4x128xf32>
    %7 = arith.mulf %6, %5 : vector<4x128xf32>
    %8 = tpu.concatenate %4, %4 in 0 : vector<2x128xf32>, vector<2x128xf32> -> vector<4x128xf32>
    %cst_3 = arith.constant dense<0.000000e+00> : vector<4x4xf32>
    %9 = tpu.matmul %7, %8, %cst_3 {dimension_numbers = #tpu.dot_dimension_numbers<[1], [1], [0], [0], [0, 0, 1, 0], [], []>} : vector<4x128xf32>, vector<4x128xf32>, vector<4x4xf32> -> vector<4x4xf32>
    %c17 = arith.constant 17 : index
    %c0_4 = arith.constant 0 : index
    %10 = vector.load %arg3[%c17, %c0_4] : memref<56x256xf32, #tpu.memory_space<vmem>>, vector<4x4xf32>
    %11 = arith.addf %9, %10 : vector<4x4xf32>
    %cst_5 = arith.constant dense<0xFF800000> : vector<4xf32>
    %12 = vector.multi_reduction <maximumf>, %11, %cst_5 [1] : vector<4x4xf32> to vector<4xf32>
    %13 = vector.shape_cast %12 : vector<4xf32> to vector<4x1xf32>
    %14 = vector.broadcast %13 : vector<4x1xf32> to vector<4x4xf32>
    %15 = arith.subf %11, %14 : vector<4x4xf32>
    %16 = math.exp %15 : vector<4x4xf32>
    %cst_6 = arith.constant dense<0.000000e+00> : vector<4xf32>
    %17 = vector.multi_reduction <add>, %16, %cst_6 [1] : vector<4x4xf32> to vector<4xf32>
    %18 = vector.shape_cast %17 : vector<4xf32> to vector<4x1xf32>
    %19 = vector.broadcast %18 : vector<4x1xf32> to vector<4x4xf32>
    %20 = arith.divf %16, %19 : vector<4x4xf32>
    %c0_7 = arith.constant 0 : index
    %c0_8 = arith.constant 0 : index
    %21 = vector.load %arg2[%c0_7, %c0_8] : memref<8x256xf32, #tpu.memory_space<vmem>>, vector<8x256xf32>
    %cst_9 = arith.constant dense<0.000000e+00> : vector<8xf32>
    %22 = vector.multi_reduction <add>, %21, %cst_9 [1] : vector<8x256xf32> to vector<8xf32>
    %23 = vector.shape_cast %22 : vector<8xf32> to vector<8x1xf32>
    %cst_10 = arith.constant 3.906250e-03 : f32
    %24 = vector.broadcast %cst_10 : f32 to vector<8x1xf32>
    %25 = arith.mulf %23, %24 : vector<8x1xf32>
    %c21 = arith.constant 21 : index
    %c0_11 = arith.constant 0 : index
    %26 = vector.load %arg3[%c21, %c0_11] : memref<56x256xf32, #tpu.memory_space<vmem>>, vector<4x8xf32>
    %c21_12 = arith.constant 21 : index
    %c8 = arith.constant 8 : index
    %27 = vector.load %arg3[%c21_12, %c8] : memref<56x256xf32, #tpu.memory_space<vmem>>, vector<4x1xf32>
    %cst_13 = arith.constant dense<0.000000e+00> : vector<4x1xf32>
    %28 = tpu.matmul %26, %25, %cst_13 {dimension_numbers = #tpu.dot_dimension_numbers<[1], [0], [0], [1], [0, 0, 1, 1], [], []>} : vector<4x8xf32>, vector<8x1xf32>, vector<4x1xf32> -> vector<4x1xf32>
    %29 = arith.addf %28, %27 : vector<4x1xf32>
    %cst_14 = arith.constant dense<0.000000e+00> : vector<4x1xf32>
    %30 = tpu.matmul %20, %29, %cst_14 {dimension_numbers = #tpu.dot_dimension_numbers<[1], [0], [0], [1], [0, 0, 1, 1], [], []>} : vector<4x4xf32>, vector<4x1xf32>, vector<4x1xf32> -> vector<4x1xf32>
    %c25 = arith.constant 25 : index
    %c0_15 = arith.constant 0 : index
    %31 = vector.load %arg3[%c25, %c0_15] : memref<56x256xf32, #tpu.memory_space<vmem>>, vector<8x4xf32>
    %cst_16 = arith.constant dense<0.000000e+00> : vector<8x1xf32>
    %32 = tpu.matmul %31, %30, %cst_16 {dimension_numbers = #tpu.dot_dimension_numbers<[1], [0], [0], [1], [0, 0, 1, 1], [], []>} : vector<8x4xf32>, vector<4x1xf32>, vector<8x1xf32> -> vector<8x1xf32>
    %c17_i32 = arith.constant 17 : i32
    %33 = tpu.dynamic_rotate %21 by %c17_i32 dim 1 : vector<8x256xf32>, i32 -> vector<8x256xf32>
    %c0_17 = arith.constant 0 : index
    %c0_18 = arith.constant 0 : index
    %34 = vector.load %arg3[%c0_17, %c0_18] : memref<56x256xf32, #tpu.memory_space<vmem>>, vector<1x256xf32>
    %35 = vector.broadcast %34 : vector<1x256xf32> to vector<8x256xf32>
    %36 = arith.mulf %33, %35 : vector<8x256xf32>
    %c16_i32 = arith.constant 16 : i32
    %37 = tpu.dynamic_rotate %21 by %c16_i32 dim 1 : vector<8x256xf32>, i32 -> vector<8x256xf32>
    %c1 = arith.constant 1 : index
    %c0_19 = arith.constant 0 : index
    %38 = vector.load %arg3[%c1, %c0_19] : memref<56x256xf32, #tpu.memory_space<vmem>>, vector<1x256xf32>
    %39 = vector.broadcast %38 : vector<1x256xf32> to vector<8x256xf32>
    %40 = arith.mulf %37, %39 : vector<8x256xf32>
    %c15_i32 = arith.constant 15 : i32
    %41 = tpu.dynamic_rotate %21 by %c15_i32 dim 1 : vector<8x256xf32>, i32 -> vector<8x256xf32>
    %c2 = arith.constant 2 : index
    %c0_20 = arith.constant 0 : index
    %42 = vector.load %arg3[%c2, %c0_20] : memref<56x256xf32, #tpu.memory_space<vmem>>, vector<1x256xf32>
    %43 = vector.broadcast %42 : vector<1x256xf32> to vector<8x256xf32>
    %44 = arith.mulf %41, %43 : vector<8x256xf32>
    %c1_i32 = arith.constant 1 : i32
    %45 = tpu.dynamic_rotate %21 by %c1_i32 dim 1 : vector<8x256xf32>, i32 -> vector<8x256xf32>
    %c3 = arith.constant 3 : index
    %c0_21 = arith.constant 0 : index
    %46 = vector.load %arg3[%c3, %c0_21] : memref<56x256xf32, #tpu.memory_space<vmem>>, vector<1x256xf32>
    %47 = vector.broadcast %46 : vector<1x256xf32> to vector<8x256xf32>
    %48 = arith.mulf %45, %47 : vector<8x256xf32>
    %c4 = arith.constant 4 : index
    %c0_22 = arith.constant 0 : index
    %49 = vector.load %arg3[%c4, %c0_22] : memref<56x256xf32, #tpu.memory_space<vmem>>, vector<1x256xf32>
    %50 = vector.broadcast %49 : vector<1x256xf32> to vector<8x256xf32>
    %51 = arith.mulf %21, %50 : vector<8x256xf32>
    %c255_i32 = arith.constant 255 : i32
    %52 = tpu.dynamic_rotate %21 by %c255_i32 dim 1 : vector<8x256xf32>, i32 -> vector<8x256xf32>
    %c5 = arith.constant 5 : index
    %c0_23 = arith.constant 0 : index
    %53 = vector.load %arg3[%c5, %c0_23] : memref<56x256xf32, #tpu.memory_space<vmem>>, vector<1x256xf32>
    %54 = vector.broadcast %53 : vector<1x256xf32> to vector<8x256xf32>
    %55 = arith.mulf %52, %54 : vector<8x256xf32>
    %c241_i32 = arith.constant 241 : i32
    %56 = tpu.dynamic_rotate %21 by %c241_i32 dim 1 : vector<8x256xf32>, i32 -> vector<8x256xf32>
    %c6 = arith.constant 6 : index
    %c0_24 = arith.constant 0 : index
    %57 = vector.load %arg3[%c6, %c0_24] : memref<56x256xf32, #tpu.memory_space<vmem>>, vector<1x256xf32>
    %58 = vector.broadcast %57 : vector<1x256xf32> to vector<8x256xf32>
    %59 = arith.mulf %56, %58 : vector<8x256xf32>
    %c240_i32 = arith.constant 240 : i32
    %60 = tpu.dynamic_rotate %21 by %c240_i32 dim 1 : vector<8x256xf32>, i32 -> vector<8x256xf32>
    %c7 = arith.constant 7 : index
    %c0_25 = arith.constant 0 : index
    %61 = vector.load %arg3[%c7, %c0_25] : memref<56x256xf32, #tpu.memory_space<vmem>>, vector<1x256xf32>
    %62 = vector.broadcast %61 : vector<1x256xf32> to vector<8x256xf32>
    %63 = arith.mulf %60, %62 : vector<8x256xf32>
    %c239_i32 = arith.constant 239 : i32
    %64 = tpu.dynamic_rotate %21 by %c239_i32 dim 1 : vector<8x256xf32>, i32 -> vector<8x256xf32>
    %c8_26 = arith.constant 8 : index
    %c0_27 = arith.constant 0 : index
    %65 = vector.load %arg3[%c8_26, %c0_27] : memref<56x256xf32, #tpu.memory_space<vmem>>, vector<1x256xf32>
    %66 = vector.broadcast %65 : vector<1x256xf32> to vector<8x256xf32>
    %67 = arith.mulf %64, %66 : vector<8x256xf32>
    %68 = tpu.concatenate %36, %40, %44, %48, %51, %55, %59, %63, %67 in 0 : vector<8x256xf32>, vector<8x256xf32>, vector<8x256xf32>, vector<8x256xf32>, vector<8x256xf32>, vector<8x256xf32>, vector<8x256xf32>, vector<8x256xf32>, vector<8x256xf32> -> vector<72x256xf32>
    %c33 = arith.constant 33 : index
    %c0_28 = arith.constant 0 : index
    %69 = vector.load %arg3[%c33, %c0_28] : memref<56x256xf32, #tpu.memory_space<vmem>>, vector<16x72xf32>
    %cst_29 = arith.constant dense<0.000000e+00> : vector<16x256xf32>
    %70 = tpu.matmul %69, %68, %cst_29 {dimension_numbers = #tpu.dot_dimension_numbers<[1], [0], [0], [1], [0, 0, 1, 1], [], []>} : vector<16x72xf32>, vector<72x256xf32>, vector<16x256xf32> -> vector<16x256xf32>
    %71 = vector.extract_strided_slice %70 {offsets = [0, 0], sizes = [8, 256], strides = [1, 1]} : vector<16x256xf32> to vector<8x256xf32>
    %72 = vector.broadcast %32 : vector<8x1xf32> to vector<8x256xf32>
    %73 = arith.mulf %72, %71 : vector<8x256xf32>
    %74 = vector.extract_strided_slice %70 {offsets = [8, 0], sizes = [8, 256], strides = [1, 1]} : vector<16x256xf32> to vector<8x256xf32>
    %75 = arith.addf %73, %74 : vector<8x256xf32>
    %c0_30 = arith.constant 0 : index
    %c0_31 = arith.constant 0 : index
    %76 = vector.load %arg4[%c0_30, %c0_31] : memref<8x256xf32, #tpu.memory_space<vmem>>, vector<8x256xf32>
    tpu.vector_store %arg4[%c0_30, %c0_31], %75 {strides = array<i32>} : memref<8x256xf32, #tpu.memory_space<vmem>>, vector<8x256xf32>,
    return
  }
  func.func @transform_0(%arg0: i32) -> (i32, i32) {
    %c0_i32 = arith.constant 0 : i32
    %c0_i32_0 = arith.constant 0 : i32
    %c0_i32_1 = arith.constant 0 : i32
    return %c0_i32, %c0_i32_0 : i32, i32
  }
  func.func @transform_1(%arg0: i32) -> (i32, i32) {
    %c0_i32 = arith.constant 0 : i32
    %c0_i32_0 = arith.constant 0 : i32
    %c0_i32_1 = arith.constant 0 : i32
    return %c0_i32, %c0_i32_0 : i32, i32
  }
  func.func @transform_2(%arg0: i32) -> (i32, i32) {
    %c0_i32 = arith.constant 0 : i32
    %c0_i32_0 = arith.constant 0 : i32
    %c0_i32_1 = arith.constant 0 : i32
    return %c0_i32, %c0_i32_0 : i32, i32
  }
  func.func @transform_3(%arg0: i32) -> (i32, i32) {
    %c0_i32 = arith.constant 0 : i32
    %c0_i32_0 = arith.constant 0 : i32
    %c0_i32_1 = arith.constant 0 : i32
    return %c0_i32, %c0_i32_0 : i32, i32
  }
}

</mosaic_0001>

<llo_original>
// kernel: _lambda_.1
$region0: #{_lambda_.1}
  #allocation0 [shape = 'u32[]', space=smem, size = 0x4, offset = 0x4, fixed_abs, tag = 'smem constant byte address 0x4 - core index']
  #allocation1 [shape = 'u32[72,128]{1,0:T(1,128)}', space=vmem, size = 0x9000, scoped, tag = 'internal scratch']
  %s0 = inlined_call_operand.vmem [shape: f32[37,128], index: 0, kind: input, shape index: {}]
  %s1 = inlined_call_operand.vmem [shape: f32[8,256], index: 1, kind: input, shape index: {}]
  %s2 = inlined_call_operand.vmem [shape: f32[56,256], index: 2, kind: input, shape index: {}]
  %s3 = inlined_call_operand.vmem [shape: f32[8,256], index: 3, kind: output, shape index: {}]
  %s4 = sld [smem:[#allocation0]]
  $region22: #{_lambda_.1} parent=0
    _
  %s6 = ssub.s32 1, %s4
  %s7 = scalar_select 0, %s6, %s4
  // Predicated region
  $region2: #{_lambda_.1} parent=0 // pred_check
    _
  $region3: #{_lambda_.1} parent=0 // pred_check_branch
    %9 = sbr.rel (0) target = $region5
  $region4: #{_lambda_.1} parent=0 // pred_region
    _
  $region5: #{_lambda_.1} parent=0 // pred_fallthru
    _
  // Predicated region
  $region6: #{_lambda_.1} parent=0 // pred_check
    _
  $region7: #{_lambda_.1} parent=0 // pred_check_branch
    %11 = sbr.rel (0) target = $region9
  $region8: #{_lambda_.1} parent=0 // pred_region
    _
  $region9: #{_lambda_.1} parent=0 // pred_fallthru
    _
  // Predicated region
  $region10: #{_lambda_.1} parent=0 // pred_check
    _
  $region11: #{_lambda_.1} parent=0 // pred_check_branch
    %13 = sbr.rel (0) target = $region13
  $region12: #{_lambda_.1} parent=0 // pred_region
    _
  $region13: #{_lambda_.1} parent=0 // pred_fallthru
    _
  %v14 = vld [vmem:[%s2 + $0x10] sm:$0xe0]
  %v15 = vld [vmem:[%s2 + $0x20] sm:$0x1]
  %v16 = vld [vmem:[%s0] sm:$0xff]
  %v17 = vld [vmem:[%s0 + $0x8] sm:$0xff]
  %v18 = vld [vmem:[%s0 + $0x10] sm:$0xff]
  %v19 = vld [vmem:[%s0 + $0x18] sm:$0xff]
  %v20 = vld [vmem:[%s0 + $0x20] sm:$0x1f]
  %vm23 = vcmask 1042432
  %v24 = vrot.slane %v14, 5
  %v25 = vrot.slane %v15, 5
  %v26 = vsel %vm23, %v24, %v25
  %vm27 = vcmask 302080
  %v28 = vsel %vm27, %v26, 0
  %vm30 = vcmask 1044480
  %v32 = vsel %vm30, %v20, 0
  %34 = vmatpush.msra.mxu0 0.0
  %35 = vmatpush.msra.mxu0 0.0
  %36 = vmatpush.msra.mxu0 0.0
  %37 = vmatpush.msra.mxu0 0.0
  %38 = vmatpush.msra.mxu0 0.0
  %39 = vmatpush.msra.mxu0 0.0
  %40 = vmatpush.msra.mxu0 0.0
  %41 = vmatpush.msra.mxu0 0.0
  %42 = vmatpush.msra.mxu0 0.0
  %43 = vmatpush.msra.mxu0 0.0
  %44 = vmatpush.msra.mxu0 0.0
  %45 = vmatpush.msra.mxu0 %v32
  %46 = vmatpush.msra.mxu0 %v19
  %47 = vmatpush.msra.mxu0 %v18
  %48 = vmatpush.msra.mxu0 %v17
  %49 = vmatpush.msra.mxu0 %v16
  %50 = vmatmul.f32.gmra.mxu0 %v28
  %v51 = vpop.f32.mrf.mxu0
  %v52 = vadd.f32 0.0, %v51
  %53 = vdwg.mxu0
  %v54 = vld [vmem:[%s2 + $0x10] sm:$0x1e]
  %v56 = vrot.slane %v52, 6
  %vm58 = vcmask 1041408
  %v59 = vsel %vm58, %v52, %v56
  %v61 = vrot.slane %v54, 1
  %v63 = vmul.f32 %v59, %v61
  %v64 = vrot.slane %v52, 2
  %v66 = vsel %vm58, %v64, %v52
  %v67 = vld [vmem:[%s2 + $0x20] sm:$0x1e]
  %v69 = vrot.slane %v67, 1
  %71 = vmatpush.xpose.msra.mxu0 0.0
  %72 = vmatpush.xpose.msra.mxu0 0.0
  %73 = vmatpush.xpose.msra.mxu0 0.0
  %74 = vmatpush.xpose.msra.mxu0 0.0
  %75 = vmatpush.xpose.msra.mxu0 0.0
  %76 = vmatpush.xpose.msra.mxu0 0.0
  %77 = vmatpush.xpose.msra.mxu0 0.0
  %78 = vmatpush.xpose.msra.mxu0 0.0
  %79 = vmatpush.xpose.msra.mxu0 0.0
  %80 = vmatpush.xpose.msra.mxu0 0.0
  %81 = vmatpush.xpose.msra.mxu0 0.0
  %82 = vmatpush.xpose.msra.mxu0 0.0
  %83 = vmatpush.xpose.msra.mxu0 0.0
  %84 = vmatpush.xpose.msra.mxu0 0.0
  %85 = vmatpush.xpose.msra.mxu0 0.0
  %86 = vmatpush.xpose.msra.mxu0 %v66
  %87 = vmatmul.f32.gmra.mxu0 %v63
  %v88 = vpop.f32.mrf.mxu0
  %v89 = vadd.f32 %v69, %v88
  %90 = vdwg.mxu0
  %vm91 = vcmask 27648
  %v92 = vsel %vm91, %v89, -inf
  %93 = vmax.xlane.f32.xlu0 %v92
  %v94 = vpop.xlane.xlu0 %93
  %v95 = vsub.f32 %v89, %v94
  %v96 = vmul.f32 %v95, 1.442695
  %v97 = vpow.pop %v96
  %v98 = vsel %vm91, %v97, 0.0
  %99 = vadd.xlane.f32.xlu0 %v98
  %v100 = vpop.xlane.xlu0 %99
  %v101 = vrcp.pop %v100
  %v102 = vmul.f32 %v100, %v101
  %v103 = vsub.f32 1.0, %v102
  %v104 = vmul.f32 %v101, %v103
  %v105 = vadd.f32 %v101, %v104
  %vm106 = vweird.f32 %v100
  %vm107 = vweird.f32 %v101
  %vm108 = vmor %vm106, %vm107
  %v109 = vsel %vm108, %v101, %v105
  %v110 = vand.u32 2147483647, %v100
  %vm111 = vcmp.eq.f32.partialorder %v110, 8.507059e+37
  %v112 = vand.u32 %v100, 2147483648
  %v113 = vor.u32 1.1754944e-38, %v112
  %v114 = vsel %vm111, %v113, %v109
  %v115 = vmul.f32 %v97, %v114
  %v116 = vld [vmem:[%s1] sm:$0xff]
  %v117 = vld [vmem:[%s1 + $0x8] sm:$0xff]
  %v118 = vadd.f32 %v116, %v117
  %119 = vadd.xlane.f32.xlu0 %v118
  %v120 = vpop.xlane.xlu0 %119
  %v121 = vmul.f32 %v120, 0.00390625
  %v122 = vld [vmem:[%s2 + $0x20] sm:$0xe0]
  %v123 = vld [vmem:[%s2 + $0x30] sm:$0x1]
  %v126 = vrot.slane %v122, 5
  %v127 = vrot.slane %v123, 5
  %v128 = vsel %vm23, %v126, %v127
  %129 = vrot.lane.b32.xlu0 %v128, 120
  %v130 = vpop.permute.xlu0 %129
  %vm132 = vcmask 64512
  %v133 = vsel %vm132, %v128, 0
  %135 = vmatpush.msra.mxu0 0.0
  %136 = vmatpush.msra.mxu0 0.0
  %137 = vmatpush.msra.mxu0 0.0
  %138 = vmatpush.msra.mxu0 0.0
  %139 = vmatpush.msra.mxu0 0.0
  %140 = vmatpush.msra.mxu0 0.0
  %141 = vmatpush.msra.mxu0 0.0
  %142 = vmatpush.msra.mxu0 0.0
  %143 = vmatpush.msra.mxu0 0.0
  %144 = vmatpush.msra.mxu0 0.0
  %145 = vmatpush.msra.mxu0 0.0
  %146 = vmatpush.msra.mxu0 0.0
  %147 = vmatpush.msra.mxu0 0.0
  %148 = vmatpush.msra.mxu0 0.0
  %149 = vmatpush.msra.mxu0 0.0
  %150 = vmatpush.msra.mxu0 %v121
  %151 = vmatmul.f32.gmra.mxu0 %v133
  %v152 = vpop.f32.mrf.mxu0
  %v153 = vadd.f32 %v130, %v152
  %154 = vdwg.mxu0
  %vm155 = vcmask 31744
  %v157 = vsel %vm155, %v115, 0
  %vm159 = vcmask 1043456
  %v161 = vsel %vm159, %v153, 0
  %163 = vmatpush.msra.mxu0 0.0
  %164 = vmatpush.msra.mxu0 0.0
  %165 = vmatpush.msra.mxu0 0.0
  %166 = vmatpush.msra.mxu0 0.0
  %167 = vmatpush.msra.mxu0 0.0
  %168 = vmatpush.msra.mxu0 0.0
  %169 = vmatpush.msra.mxu0 0.0
  %170 = vmatpush.msra.mxu0 0.0
  %171 = vmatpush.msra.mxu0 0.0
  %172 = vmatpush.msra.mxu0 0.0
  %173 = vmatpush.msra.mxu0 0.0
  %174 = vmatpush.msra.mxu0 0.0
  %175 = vmatpush.msra.mxu0 0.0
  %176 = vmatpush.msra.mxu0 0.0
  %177 = vmatpush.msra.mxu0 0.0
  %178 = vmatpush.msra.mxu0 %v161
  %179 = vmatmul.f32.gmra.mxu0 %v157
  %v180 = vpop.f32.mrf.mxu0
  %v181 = vadd.f32 0.0, %v180
  %182 = vdwg.mxu0
  %v183 = vld [vmem:[%s2 + $0x30] sm:$0xfe]
  %v184 = vld [vmem:[%s2 + $0x40] sm:$0x1]
  %vm187 = vcmask 1046528
  %v188 = vrot.slane %v183, 1
  %v189 = vrot.slane %v184, 1
  %v190 = vsel %vm187, %v188, %v189
  %v191 = vsel %vm155, %v190, 0
  %v194 = vsel %vm159, %v181, 0
  %196 = vmatpush.msra.mxu0 0.0
  %197 = vmatpush.msra.mxu0 0.0
  %198 = vmatpush.msra.mxu0 0.0
  %199 = vmatpush.msra.mxu0 0.0
  %200 = vmatpush.msra.mxu0 0.0
  %201 = vmatpush.msra.mxu0 0.0
  %202 = vmatpush.msra.mxu0 0.0
  %203 = vmatpush.msra.mxu0 0.0
  %204 = vmatpush.msra.mxu0 0.0
  %205 = vmatpush.msra.mxu0 0.0
  %206 = vmatpush.msra.mxu0 0.0
  %207 = vmatpush.msra.mxu0 0.0
  %208 = vmatpush.msra.mxu0 0.0
  %209 = vmatpush.msra.mxu0 0.0
  %210 = vmatpush.msra.mxu0 0.0
  %211 = vmatpush.msra.mxu0 %v194
  %212 = vmatmul.f32.gmra.mxu0 %v191
  %v213 = vpop.f32.mrf.mxu0
  %v214 = vadd.f32 0.0, %v213
  %215 = vdwg.mxu0
  %216 = vrot.lane.b32.xlu0 %v116, 17
  %v217 = vpop.permute.xlu0 %216
  %218 = vrot.lane.b32.xlu0 %v117, 17
  %v219 = vpop.permute.xlu0 %218
  %v220 = vlaneseq
  %v221 = vand.u32 %v220, 127
  %vm222 = vcmp.lt.s32.totalorder %v221, 17
  %v223 = vsel %vm222, %v217, %v219
  %v224 = vsel %vm222, %v219, %v217
  %v225 = vld [vmem:[%s2] ss:$8 sm:$0x3]
  %v227 = vperm.slane %v225, 0
  %v228 = vperm.slane %v225, 1
  %v231 = vmul.f32 %v224, %v227
  %v232 = vmul.f32 %v223, %v228
  %233 = vrot.lane.b32.xlu0 %v116, 16
  %v234 = vpop.permute.xlu0 %233
  %235 = vrot.lane.b32.xlu0 %v117, 16
  %v236 = vpop.permute.xlu0 %235
  %vm237 = vcmp.lt.s32.totalorder %v221, 16
  %v238 = vsel %vm237, %v234, %v236
  %v239 = vsel %vm237, %v236, %v234
  %s240 = scalar_lea.vmem %s2, 1
  %v241 = vld [vmem:[%s240] ss:$8 sm:$0x3]
  %v243 = vperm.slane %v241, 0
  %v244 = vperm.slane %v241, 1
  %v247 = vmul.f32 %v239, %v243
  %v248 = vmul.f32 %v238, %v244
  %249 = vrot.lane.b32.xlu0 %v116, 15
  %v250 = vpop.permute.xlu0 %249
  %251 = vrot.lane.b32.xlu0 %v117, 15
  %v252 = vpop.permute.xlu0 %251
  %vm253 = vcmp.lt.s32.totalorder %v221, 15
  %v254 = vsel %vm253, %v250, %v252
  %v255 = vsel %vm253, %v252, %v250
  %s256 = scalar_lea.vmem %s2, 2
  %v257 = vld [vmem:[%s256] ss:$8 sm:$0x3]
  %v259 = vperm.slane %v257, 0
  %v260 = vperm.slane %v257, 1
  %v263 = vmul.f32 %v255, %v259
  %v264 = vmul.f32 %v254, %v260
  %265 = vrot.lane.b32.xlu0 %v116, 1
  %v266 = vpop.permute.xlu0 %265
  %267 = vrot.lane.b32.xlu0 %v117, 1
  %v268 = vpop.permute.xlu0 %267
  %vm269 = vcmp.lt.s32.totalorder %v221, 1
  %v270 = vsel %vm269, %v266, %v268
  %v271 = vsel %vm269, %v268, %v266
  %s272 = scalar_lea.vmem %s2, 3
  %v273 = vld [vmem:[%s272] ss:$8 sm:$0x3]
  %v275 = vperm.slane %v273, 0
  %v276 = vperm.slane %v273, 1
  %v279 = vmul.f32 %v271, %v275
  %v280 = vmul.f32 %v270, %v276
  %s281 = scalar_lea.vmem %s2, 4
  %v282 = vld [vmem:[%s281] ss:$8 sm:$0x3]
  %v284 = vperm.slane %v282, 0
  %v285 = vperm.slane %v282, 1
  %v288 = vmul.f32 %v116, %v284
  %v289 = vmul.f32 %v117, %v285
  %290 = vrot.lane.b32.xlu0 %v116, 127
  %v291 = vpop.permute.xlu0 %290
  %292 = vrot.lane.b32.xlu0 %v117, 127
  %v293 = vpop.permute.xlu0 %292
  %vm294 = vcmp.lt.s32.totalorder %v221, 127
  %v295 = vsel %vm294, %v291, %v293
  %v296 = vsel %vm294, %v293, %v291
  %s297 = scalar_lea.vmem %s2, 5
  %v298 = vld [vmem:[%s297] ss:$8 sm:$0x3]
  %v300 = vperm.slane %v298, 0
  %v301 = vperm.slane %v298, 1
  %v304 = vmul.f32 %v295, %v300
  %v305 = vmul.f32 %v296, %v301
  %306 = vrot.lane.b32.xlu0 %v116, 113
  %v307 = vpop.permute.xlu0 %306
  %308 = vrot.lane.b32.xlu0 %v117, 113
  %v309 = vpop.permute.xlu0 %308
  %vm310 = vcmp.lt.s32.totalorder %v221, 113
  %v311 = vsel %vm310, %v307, %v309
  %v312 = vsel %vm310, %v309, %v307
  %s313 = scalar_lea.vmem %s2, 6
  %v314 = vld [vmem:[%s313] ss:$8 sm:$0x3]
  %v316 = vperm.slane %v314, 0
  %v317 = vperm.slane %v314, 1
  %v320 = vmul.f32 %v311, %v316
  %v321 = vmul.f32 %v312, %v317
  %322 = vrot.lane.b32.xlu0 %v116, 112
  %v323 = vpop.permute.xlu0 %322
  %324 = vrot.lane.b32.xlu0 %v117, 112
  %v325 = vpop.permute.xlu0 %324
  %vm326 = vcmp.lt.s32.totalorder %v221, 112
  %v327 = vsel %vm326, %v323, %v325
  %v328 = vsel %vm326, %v325, %v323
  %s329 = scalar_lea.vmem %s2, 7
  %v330 = vld [vmem:[%s329] ss:$8 sm:$0x3]
  %v332 = vperm.slane %v330, 0
  %v333 = vperm.slane %v330, 1
  %v336 = vmul.f32 %v327, %v332
  %v337 = vmul.f32 %v328, %v333
  %338 = vrot.lane.b32.xlu0 %v116, 111
  %v339 = vpop.permute.xlu0 %338
  %340 = vrot.lane.b32.xlu0 %v117, 111
  %v341 = vpop.permute.xlu0 %340
  %vm342 = vcmp.lt.s32.totalorder %v221, 111
  %v343 = vsel %vm342, %v339, %v341
  %v344 = vsel %vm342, %v341, %v339
  %s345 = scalar_lea.vmem %s2, 16
  %v346 = vld [vmem:[%s345] ss:$8 sm:$0x3]
  %v348 = vperm.slane %v346, 0
  %v349 = vperm.slane %v346, 1
  %v352 = vmul.f32 %v343, %v348
  %v353 = vmul.f32 %v344, %v349
  %v354 = vld [vmem:[%s2 + $0x40] sm:$0xfe]
  %v355 = vld [vmem:[%s2 + $0x50] sm:$0xff]
  %v356 = vld [vmem:[%s2 + $0x60] sm:$0x1]
  %v360 = vrot.slane %v354, 1
  %v361 = vrot.slane %v355, 1
  %v362 = vsel %vm187, %v360, %v361
  %v363 = vrot.slane %v356, 1
  %v364 = vsel %vm187, %v361, %v363
  %vm365 = vcmask 588800
  %v366 = vsel %vm365, %v362, 0
  %v368 = vsel %vm365, %v364, 0
  %370 = vmatpush.msra.mxu0 0.0
  %371 = vmatpush.msra.mxu0 0.0
  %372 = vmatpush.msra.mxu0 0.0
  %373 = vmatpush.msra.mxu0 0.0
  %374 = vmatpush.msra.mxu0 0.0
  %375 = vmatpush.msra.mxu0 0.0
  %376 = vmatpush.msra.mxu0 0.0
  %377 = vmatpush.msra.mxu0 %v352
  %378 = vmatpush.msra.mxu0 %v336
  %379 = vmatpush.msra.mxu0 %v320
  %380 = vmatpush.msra.mxu0 %v304
  %381 = vmatpush.msra.mxu0 %v288
  %382 = vmatpush.msra.mxu0 %v279
  %383 = vmatpush.msra.mxu0 %v263
  %384 = vmatpush.msra.mxu0 %v247
  %385 = vmatpush.msra.mxu0 %v231
  %386 = vmatmul.f32.gmra.mxu0 %v366
  %v387 = vpop.f32.mrf.mxu0
  %v388 = vadd.f32 0.0, %v387
  %389 = vmatmul.f32.gmra.mxu0 %v368
  %v390 = vpop.f32.mrf.mxu0
  %v391 = vadd.f32 0.0, %v390
  %392 = vdwg.mxu0
  %393 = vmatpush.msra.mxu0 0.0
  %394 = vmatpush.msra.mxu0 0.0
  %395 = vmatpush.msra.mxu0 0.0
  %396 = vmatpush.msra.mxu0 0.0
  %397 = vmatpush.msra.mxu0 0.0
  %398 = vmatpush.msra.mxu0 0.0
  %399 = vmatpush.msra.mxu0 0.0
  %400 = vmatpush.msra.mxu0 %v353
  %401 = vmatpush.msra.mxu0 %v337
  %402 = vmatpush.msra.mxu0 %v321
  %403 = vmatpush.msra.mxu0 %v305
  %404 = vmatpush.msra.mxu0 %v289
  %405 = vmatpush.msra.mxu0 %v280
  %406 = vmatpush.msra.mxu0 %v264
  %407 = vmatpush.msra.mxu0 %v248
  %408 = vmatpush.msra.mxu0 %v232
  %409 = vmatmul.f32.gmra.mxu0 %v366
  %v410 = vpop.f32.mrf.mxu0
  %v411 = vadd.f32 0.0, %v410
  %412 = vmatmul.f32.gmra.mxu0 %v368
  %v413 = vpop.f32.mrf.mxu0
  %v414 = vadd.f32 0.0, %v413
  %415 = vdwg.mxu0
  %417 = vset.pattern.permute.xlu0 0
  %418 = vperm.xlu0 %417, %v214
  %v419 = vpop.permute.xlu0 %418
  %v421 = vmul.f32 %v419, %v388
  %v422 = vmul.f32 %v419, %v411
  %v423 = vadd.f32 %v421, %v391
  %v424 = vadd.f32 %v422, %v414
  %425 = vst [vmem:[%s3] sm:$0xff] %v423
  %426 = vst [vmem:[%s3 + $0x8] sm:$0xff] %v424
  // Predicated region
  $region14: #{_lambda_.1} parent=0 // pred_check
    _
  $region15: #{_lambda_.1} parent=0 // pred_check_branch
    %428 = sbr.rel (0) target = $region17
  $region16: #{_lambda_.1} parent=0 // pred_region
    _
  $region17: #{_lambda_.1} parent=0 // pred_fallthru
    _
  // Predicated region
  $region18: #{_lambda_.1} parent=0 // pred_check
    _
  $region19: #{_lambda_.1} parent=0 // pred_check_branch
    %430 = sbr.rel (0) target = $region21
  $region20: #{_lambda_.1} parent=0 // pred_region
    _
  $region21: #{_lambda_.1} parent=0 // pred_fallthru
    _

</llo_original>
